<compile_context>
chip_gen: v7x
topology: tpu7x:2x2x1
jax: 0.10.0
libtpu: 0.0.40
codegen_flags: <defaults>
</compile_context>

<pallas_src>
import jax
import jax.numpy as jnp
from jax.experimental import pallas as pl
from jax.experimental.pallas import tpu as pltpu


def fcn_kernel(xt_ref, ut_ref, w1x_ref, w1u_ref, b1_ref,
               w2_ref, b2_ref, w3_ref, b3_ref, o_ref):
    # xt_ref:  (d,  tb)   lane-dense over batch
    # ut_ref:  (ud, tb)
    # w1x_ref: (latent, d)   w1u_ref: (latent, ud)   b1_ref: (latent, 1)
    # w2_ref:  (latent, latent)                      b2_ref: (latent, 1)
    # w3_ref:  (hidden, latent)                      b3_ref: (hidden, 1)
    # o_ref:   (hidden, tb)

    # Layer 1: Linear(d+ud -> latent) on cat([x_, u]) without materializing the
    # concat: W1 is split into its x / u column blocks.  Then ReLU.
    h1 = jnp.dot(w1x_ref[...], xt_ref[...], preferred_element_type=jnp.float32)
    if ut_ref.shape[0] == 1:
        # ud == 1: K=1 "matmul" is just an outer product -> do it on the VPU.
        h1 = h1 + w1u_ref[...] * ut_ref[...]
    else:
        h1 = h1 + jnp.dot(w1u_ref[...], ut_ref[...],
                          preferred_element_type=jnp.float32)
    h1 = jnp.maximum(h1 + b1_ref[...], 0.0)

    # Layer 2: Linear(latent -> latent), ReLU.
    h2 = jnp.dot(w2_ref[...], h1, preferred_element_type=jnp.float32) + b2_ref[...]
    h2 = jnp.maximum(h2, 0.0)

    # Layer 3: Linear(latent -> hidden), no activation.
    out = jnp.dot(w3_ref[...], h2, preferred_element_type=jnp.float32) + b3_ref[...]
    o_ref[...] = out.astype(o_ref.dtype)


_TB_MAX = 32768   # lane width per step: an (8, 32768) f32 slab is ~1 MiB in VMEM
_TB_LANE = 256    # multiple of 256 fills the v6e/v7x MXU N dim; 128-aligned for v5e


def _round_up(x, m):
    return ((x + m - 1) // m) * m


def _pick_tb(B):
    """Big tiles (amortize per-step overhead) but keep >=2 grid steps for
    large B so both v7x TensorCores get work on the 'parallel' batch axis."""
    if B <= _TB_LANE:
        return B                          # whole tiny batch, exact block
    if B <= 2 * _TB_LANE:
        return _TB_LANE
    return min(_TB_MAX, _round_up(pl.cdiv(B, 2), _TB_LANE))


def fcn_forward_fm(xt, ut, params, *, tb=None):
    """Core lane-dense path (no layout-plumbing HBM passes).

    xt: (d, B), ut: (ud, B) feature-major (batch on the 128-lane axis).
    Returns (hidden, B) feature-major.
    """
    d, B = xt.shape
    ud = ut.shape[0]
    latent_dim, in_dim = params["w1"].shape
    assert in_dim == d + ud
    hidden_dim = params["w3"].shape[0]

    if tb is None:
        tb = _pick_tb(B)
    else:
        tb = max(_TB_LANE, _round_up(int(tb), _TB_LANE))
    grid = (pl.cdiv(B, tb),)              # ragged edge block handled by Pallas masking

    w1x = params["w1"][:, :d]
    w1u = params["w1"][:, d:]

    resident = lambda shape: pl.BlockSpec(shape, lambda i: (0, 0))

    flops = 2 * B * (in_dim * latent_dim + latent_dim * latent_dim
                     + latent_dim * hidden_dim)
    param_bytes = 4 * (latent_dim * in_dim + latent_dim
                       + latent_dim * latent_dim + latent_dim
                       + hidden_dim * latent_dim + hidden_dim)
    bytes_accessed = 4 * B * (in_dim + hidden_dim) + param_bytes

    return pl.pallas_call(
        fcn_kernel,
        out_shape=jax.ShapeDtypeStruct((hidden_dim, B), jnp.float32),
        grid=grid,
        in_specs=[
            pl.BlockSpec((d, tb), lambda i: (0, i)),           # xt block
            pl.BlockSpec((ud, tb), lambda i: (0, i)),          # ut block
            resident((latent_dim, d)),                         # w1[:, :d]
            resident((latent_dim, ud)),                        # w1[:, d:]
            resident((latent_dim, 1)),                         # b1
            resident((latent_dim, latent_dim)),                # w2
            resident((latent_dim, 1)),                         # b2
            resident((hidden_dim, latent_dim)),                # w3
            resident((hidden_dim, 1)),                         # b3
        ],
        out_specs=pl.BlockSpec((hidden_dim, tb), lambda i: (0, i)),
        compiler_params=pltpu.CompilerParams(
            dimension_semantics=("parallel",),    # megacore-shardable batch axis
            vmem_limit_bytes=32 * 1024 * 1024,    # tiles <= ~4 MiB; safe on v7x 64 MiB
        ),
        cost_estimate=pl.CostEstimate(
            flops=flops, transcendentals=0, bytes_accessed=bytes_accessed),
    )(xt.astype(jnp.float32), ut.astype(jnp.float32),
      w1x, w1u, params["b1"], params["w2"], params["b2"],
      params["w3"], params["b3"])


def fcn_forward(x_, u, params, *, tb=None):
    """PyTorch-layout wrapper: x_ (B, d), u (B, ud) -> (B, hidden).

    The two transposes here are pure layout plumbing (extra HBM passes for a
    memory-bound op); in an integrated graph keep activations feature-major
    and call fcn_forward_fm directly.
    """
    return fcn_forward_fm(x_.T, u.T, params, tb=tb).T


def init_params(key, d=2, ud=1, latent_dim=16):
    """PyTorch Linear-style uniform fan-in init.  Weights in (out, in) layout;
    biases as (out, 1) columns so they broadcast over the lane (batch) axis."""
    input_dim = d + ud
    hidden_dim = d
    ks = jax.random.split(key, 6)

    def lin(kw, kb, fan_in, fan_out):
        bound = 1.0 / (fan_in ** 0.5)
        w = jax.random.uniform(kw, (fan_out, fan_in), jnp.float32, -bound, bound)
        b = jax.random.uniform(kb, (fan_out, 1), jnp.float32, -bound, bound)
        return w, b

    w1, b1 = lin(ks[0], ks[1], input_dim, latent_dim)
    w2, b2 = lin(ks[2], ks[3], latent_dim, latent_dim)
    w3, b3 = lin(ks[4], ks[5], latent_dim, hidden_dim)
    return {"w1": w1, "b1": b1, "w2": w2, "b2": b2, "w3": w3, "b3": b3}


def fcn_reference(x_, u, p):
    """Pure-JAX reference of the same forward pass (PyTorch layout)."""
    xin = jnp.concatenate([x_, u], axis=1)
    h1 = jnp.maximum(xin @ p["w1"].T + p["b1"].T, 0.0)
    h2 = jnp.maximum(h1 @ p["w2"].T + p["b2"].T, 0.0)
    return h2 @ p["w3"].T + p["b3"].T


if __name__ == "__main__":
    key = jax.random.PRNGKey(0)
    k_p, k_x, k_u, k_x2, k_u2, k_x3, k_u3 = jax.random.split(key, 7)

    d, ud, latent_dim = 2, 1, 16
    params = init_params(k_p, d=d, ud=ud, latent_dim=latent_dim)

    # 1) Small batch, PyTorch (N, C) layout — single exact grid step.
    B = 8
    x_ = jax.random.normal(k_x, (B, d), jnp.float32)
    u = jax.random.normal(k_u, (B, ud), jnp.float32)
    out = fcn_forward(x_, u, params)
    jax.block_until_ready(out)
    ref = fcn_reference(x_, u, params)
    assert out.shape == (B, d)
    assert jnp.allclose(out, ref, atol=1e-5, rtol=1e-5)

    # 2) Multi-step, ragged batch grid (B not a multiple of tb): exercises the
    #    unpadded cdiv grid + Pallas edge-block masking.
    B2 = 300
    x2 = jax.random.normal(k_x2, (B2, d), jnp.float32)
    u2 = jax.random.normal(k_u2, (B2, ud), jnp.float32)
    out2 = fcn_forward(x2, u2, params)
    jax.block_until_ready(out2)
    ref2 = fcn_reference(x2, u2, params)
    assert out2.shape == (B2, d)
    assert jnp.allclose(out2, ref2, atol=1e-5, rtol=1e-5)

    # 3) Feature-major fast path (no layout-plumbing transposes at all).
    B3 = 1000
    x3t = jax.random.normal(k_x3, (d, B3), jnp.float32)
    u3t = jax.random.normal(k_u3, (ud, B3), jnp.float32)
    out3t = fcn_forward_fm(x3t, u3t, params)
    jax.block_until_ready(out3t)
    ref3 = fcn_reference(x3t.T, u3t.T, params)
    assert out3t.shape == (d, B3)
    assert jnp.allclose(out3t.T, ref3, atol=1e-5, rtol=1e-5)

    print("KERNEL_OK")
</pallas_src>

<mosaic_0001>
module attributes {stable_mosaic.version = 11 : i64} {
  func.func @fcn_kernel(%arg0: i32, %arg1: memref<2x8xf32, #tpu.memory_space<vmem>>, %arg2: memref<1x8xf32, #tpu.memory_space<vmem>>, %arg3: memref<16x2xf32, #tpu.memory_space<vmem>>, %arg4: memref<16x1xf32, #tpu.memory_space<vmem>>, %arg5: memref<16x1xf32, #tpu.memory_space<vmem>>, %arg6: memref<16x16xf32, #tpu.memory_space<vmem>>, %arg7: memref<16x1xf32, #tpu.memory_space<vmem>>, %arg8: memref<2x16xf32, #tpu.memory_space<vmem>>, %arg9: memref<2x1xf32, #tpu.memory_space<vmem>>, %arg10: memref<2x8xf32, #tpu.memory_space<vmem>>) attributes {dimension_semantics = [#tpu.dimension_semantics<parallel>], iteration_bounds = array<i64: 1>, scalar_prefetch = 0 : i64, scratch_operands = 0 : i64, tpu.core_type = #tpu.core_type<tc>, window_params = [{transform_indices = @transform_0, window_bounds = array<i64: 2, 8>}, {transform_indices = @transform_1, window_bounds = array<i64: 1, 8>}, {pipeline_mode = #tpu.pipeline_mode<synchronous>, transform_indices = @transform_2, window_bounds = array<i64: 16, 2>}, {pipeline_mode = #tpu.pipeline_mode<synchronous>, transform_indices = @transform_3, window_bounds = array<i64: 16, 1>}, {pipeline_mode = #tpu.pipeline_mode<synchronous>, transform_indices = @transform_4, window_bounds = array<i64: 16, 1>}, {pipeline_mode = #tpu.pipeline_mode<synchronous>, transform_indices = @transform_5, window_bounds = array<i64: 16, 16>}, {pipeline_mode = #tpu.pipeline_mode<synchronous>, transform_indices = @transform_6, window_bounds = array<i64: 16, 1>}, {pipeline_mode = #tpu.pipeline_mode<synchronous>, transform_indices = @transform_7, window_bounds = array<i64: 2, 16>}, {pipeline_mode = #tpu.pipeline_mode<synchronous>, transform_indices = @transform_8, window_bounds = array<i64: 2, 1>}, {transform_indices = @transform_9, window_bounds = array<i64: 2, 8>}]} {
    %c0 = arith.constant 0 : index
    %c0_0 = arith.constant 0 : index
    %0 = vector.load %arg3[%c0, %c0_0] : memref<16x2xf32, #tpu.memory_space<vmem>>, vector<16x2xf32>
    %c0_1 = arith.constant 0 : index
    %c0_2 = arith.constant 0 : index
    %1 = vector.load %arg1[%c0_1, %c0_2] : memref<2x8xf32, #tpu.memory_space<vmem>>, vector<2x8xf32>
    %cst = arith.constant dense<0.000000e+00> : vector<16x8xf32>
    %2 = tpu.matmul %0, %1, %cst {dimension_numbers = #tpu.dot_dimension_numbers<[1], [0], [0], [1], [0, 0, 1, 1], [], []>} : vector<16x2xf32>, vector<2x8xf32>, vector<16x8xf32> -> vector<16x8xf32>
    %c0_3 = arith.constant 0 : index
    %c0_4 = arith.constant 0 : index
    %3 = vector.load %arg4[%c0_3, %c0_4] : memref<16x1xf32, #tpu.memory_space<vmem>>, vector<16x1xf32>
    %c0_5 = arith.constant 0 : index
    %c0_6 = arith.constant 0 : index
    %4 = vector.load %arg2[%c0_5, %c0_6] : memref<1x8xf32, #tpu.memory_space<vmem>>, vector<1x8xf32>
    %5 = vector.broadcast %3 : vector<16x1xf32> to vector<16x8xf32>
    %6 = vector.broadcast %4 : vector<1x8xf32> to vector<16x8xf32>
    %7 = arith.mulf %5, %6 : vector<16x8xf32>
    %8 = arith.addf %2, %7 : vector<16x8xf32>
    %c0_7 = arith.constant 0 : index
    %c0_8 = arith.constant 0 : index
    %9 = vector.load %arg5[%c0_7, %c0_8] : memref<16x1xf32, #tpu.memory_space<vmem>>, vector<16x1xf32>
    %10 = vector.broadcast %9 : vector<16x1xf32> to vector<16x8xf32>
    %11 = arith.addf %8, %10 : vector<16x8xf32>
    %cst_9 = arith.constant 0.000000e+00 : f32
    %12 = vector.broadcast %cst_9 : f32 to vector<16x8xf32>
    %13 = arith.maximumf %11, %12 : vector<16x8xf32>
    %c0_10 = arith.constant 0 : index
    %c0_11 = arith.constant 0 : index
    %14 = vector.load %arg6[%c0_10, %c0_11] : memref<16x16xf32, #tpu.memory_space<vmem>>, vector<16x16xf32>
    %cst_12 = arith.constant dense<0.000000e+00> : vector<16x8xf32>
    %15 = tpu.matmul %14, %13, %cst_12 {dimension_numbers = #tpu.dot_dimension_numbers<[1], [0], [0], [1], [0, 0, 1, 1], [], []>} : vector<16x16xf32>, vector<16x8xf32>, vector<16x8xf32> -> vector<16x8xf32>
    %c0_13 = arith.constant 0 : index
    %c0_14 = arith.constant 0 : index
    %16 = vector.load %arg7[%c0_13, %c0_14] : memref<16x1xf32, #tpu.memory_space<vmem>>, vector<16x1xf32>
    %17 = vector.broadcast %16 : vector<16x1xf32> to vector<16x8xf32>
    %18 = arith.addf %15, %17 : vector<16x8xf32>
    %cst_15 = arith.constant 0.000000e+00 : f32
    %19 = vector.broadcast %cst_15 : f32 to vector<16x8xf32>
    %20 = arith.maximumf %18, %19 : vector<16x8xf32>
    %c0_16 = arith.constant 0 : index
    %c0_17 = arith.constant 0 : index
    %21 = vector.load %arg8[%c0_16, %c0_17] : memref<2x16xf32, #tpu.memory_space<vmem>>, vector<2x16xf32>
    %cst_18 = arith.constant dense<0.000000e+00> : vector<2x8xf32>
    %22 = tpu.matmul %21, %20, %cst_18 {dimension_numbers = #tpu.dot_dimension_numbers<[1], [0], [0], [1], [0, 0, 1, 1], [], []>} : vector<2x16xf32>, vector<16x8xf32>, vector<2x8xf32> -> vector<2x8xf32>
    %c0_19 = arith.constant 0 : index
    %c0_20 = arith.constant 0 : index
    %23 = vector.load %arg9[%c0_19, %c0_20] : memref<2x1xf32, #tpu.memory_space<vmem>>, vector<2x1xf32>
    %24 = vector.broadcast %23 : vector<2x1xf32> to vector<2x8xf32>
    %25 = arith.addf %22, %24 : vector<2x8xf32>
    %c0_21 = arith.constant 0 : index
    %c0_22 = arith.constant 0 : index
    %26 = vector.load %arg10[%c0_21, %c0_22] : memref<2x8xf32, #tpu.memory_space<vmem>>, vector<2x8xf32>
    tpu.vector_store %arg10[%c0_21, %c0_22], %25 {strides = array<i32>} : memref<2x8xf32, #tpu.memory_space<vmem>>, vector<2x8xf32>,
    return
  }
  func.func @transform_0(%arg0: i32) -> (i32, i32) {
    %c0_i32 = arith.constant 0 : i32
    %c0_i32_0 = arith.constant 0 : i32
    return %c0_i32, %arg0 : i32, i32
  }
  func.func @transform_1(%arg0: i32) -> (i32, i32) {
    %c0_i32 = arith.constant 0 : i32
    %c0_i32_0 = arith.constant 0 : i32
    return %c0_i32, %arg0 : i32, i32
  }
  func.func @transform_2(%arg0: i32) -> (i32, i32) {
    %c0_i32 = arith.constant 0 : i32
    %c0_i32_0 = arith.constant 0 : i32
    %c0_i32_1 = arith.constant 0 : i32
    return %c0_i32, %c0_i32_0 : i32, i32
  }
  func.func @transform_3(%arg0: i32) -> (i32, i32) {
    %c0_i32 = arith.constant 0 : i32
    %c0_i32_0 = arith.constant 0 : i32
    %c0_i32_1 = arith.constant 0 : i32
    return %c0_i32, %c0_i32_0 : i32, i32
  }
  func.func @transform_4(%arg0: i32) -> (i32, i32) {
    %c0_i32 = arith.constant 0 : i32
    %c0_i32_0 = arith.constant 0 : i32
    %c0_i32_1 = arith.constant 0 : i32
    return %c0_i32, %c0_i32_0 : i32, i32
  }
  func.func @transform_5(%arg0: i32) -> (i32, i32) {
    %c0_i32 = arith.constant 0 : i32
    %c0_i32_0 = arith.constant 0 : i32
    %c0_i32_1 = arith.constant 0 : i32
    return %c0_i32, %c0_i32_0 : i32, i32
  }
  func.func @transform_6(%arg0: i32) -> (i32, i32) {
    %c0_i32 = arith.constant 0 : i32
    %c0_i32_0 = arith.constant 0 : i32
    %c0_i32_1 = arith.constant 0 : i32
    return %c0_i32, %c0_i32_0 : i32, i32
  }
  func.func @transform_7(%arg0: i32) -> (i32, i32) {
    %c0_i32 = arith.constant 0 : i32
    %c0_i32_0 = arith.constant 0 : i32
    %c0_i32_1 = arith.constant 0 : i32
    return %c0_i32, %c0_i32_0 : i32, i32
  }
  func.func @transform_8(%arg0: i32) -> (i32, i32) {
    %c0_i32 = arith.constant 0 : i32
    %c0_i32_0 = arith.constant 0 : i32
    %c0_i32_1 = arith.constant 0 : i32
    return %c0_i32, %c0_i32_0 : i32, i32
  }
  func.func @transform_9(%arg0: i32) -> (i32, i32) {
    %c0_i32 = arith.constant 0 : i32
    %c0_i32_0 = arith.constant 0 : i32
    return %c0_i32, %arg0 : i32, i32
  }
}

</mosaic_0001>

<llo_original>
// kernel: tpu_custom_call.1
$region0: #{tpu_custom_call.1}
  #allocation0 [shape = 'u32[]', space=smem, size = 0x4, offset = 0x4, fixed_abs, tag = 'smem constant byte address 0x4 - core index']
  #allocation1 [shape = 'u32[144,128]{1,0:T(1,128)}', space=vmem, size = 0x12000, scoped, tag = 'internal scratch']
  %s0 = inlined_call_operand.vmem [shape: f32[2,8], index: 0, kind: input, shape index: {}]
  %s1 = inlined_call_operand.vmem [shape: f32[1,8], index: 1, kind: input, shape index: {}]
  %s2 = inlined_call_operand.vmem [shape: f32[16,2], index: 2, kind: input, shape index: {}]
  %s3 = inlined_call_operand.vmem [shape: f32[16,1], index: 3, kind: input, shape index: {}]
  %s4 = inlined_call_operand.vmem [shape: f32[16,1], index: 4, kind: input, shape index: {}]
  %s5 = inlined_call_operand.vmem [shape: f32[16,16], index: 5, kind: input, shape index: {}]
  %s6 = inlined_call_operand.vmem [shape: f32[16,1], index: 6, kind: input, shape index: {}]
  %s7 = inlined_call_operand.vmem [shape: f32[2,16], index: 7, kind: input, shape index: {}]
  %s8 = inlined_call_operand.vmem [shape: f32[2,1], index: 8, kind: input, shape index: {}]
  %s9 = inlined_call_operand.hbm [shape: f32[2,8], index: 9, kind: output, shape index: {}]
  %s10 = sld [smem:[#allocation0]]
  $region46: #{tpu_custom_call.1} parent=0
    _
  %s12 = ssub.s32 1, %s10
  %s13 = scalar_select 0, %s12, %s10
  $region1: #{tpu_custom_call.1} parent=0
    #allocation2 [shape = 'u8[1024]{0}', space=vmem, size = 0x400, scoped, tag = 'output window, operand 0, single buffered']
    #allocation3 [shape = 's32[1]{0}', space=sflag, size = 0x4, scoped, tag = 'scoped memory for tpu_custom_call.1']
    %14 = vsyncpa [#allocation3], 0
    // Predicated region
    $region2: #{tpu_custom_call.1} parent=1 // pred_check
      _
    $region3: #{tpu_custom_call.1} parent=1 // pred_check_branch
      %16 = sbr.rel (0) target = $region5
    $region4: #{tpu_custom_call.1} parent=1 // pred_region
      _
    $region5: #{tpu_custom_call.1} parent=1 // pred_fallthru
      _
    // Predicated region
    $region6: #{tpu_custom_call.1} parent=1 // pred_check
      _
    $region7: #{tpu_custom_call.1} parent=1 // pred_check_branch
      %18 = sbr.rel (0) target = $region9
    $region8: #{tpu_custom_call.1} parent=1 // pred_region
      _
    $region9: #{tpu_custom_call.1} parent=1 // pred_fallthru
      _
    // Predicated region
    $region10: #{tpu_custom_call.1} parent=1 // pred_check
      _
    $region11: #{tpu_custom_call.1} parent=1 // pred_check_branch
      %20 = sbr.rel (0) target = $region13
    $region12: #{tpu_custom_call.1} parent=1 // pred_region
      _
    $region13: #{tpu_custom_call.1} parent=1 // pred_fallthru
      _
    // Predicated region
    $region14: #{tpu_custom_call.1} parent=1 // pred_check
      _
    $region15: #{tpu_custom_call.1} parent=1 // pred_check_branch
      %22 = sbr.rel (0) target = $region17
    $region16: #{tpu_custom_call.1} parent=1 // pred_region
      _
    $region17: #{tpu_custom_call.1} parent=1 // pred_fallthru
      _
    // Predicated region
    $region18: #{tpu_custom_call.1} parent=1 // pred_check
      _
    $region19: #{tpu_custom_call.1} parent=1 // pred_check_branch
      %24 = sbr.rel (0) target = $region21
    $region20: #{tpu_custom_call.1} parent=1 // pred_region
      _
    $region21: #{tpu_custom_call.1} parent=1 // pred_fallthru
      _
    // Predicated region
    $region22: #{tpu_custom_call.1} parent=1 // pred_check
      _
    $region23: #{tpu_custom_call.1} parent=1 // pred_check_branch
      %26 = sbr.rel (0) target = $region25
    $region24: #{tpu_custom_call.1} parent=1 // pred_region
      _
    $region25: #{tpu_custom_call.1} parent=1 // pred_fallthru
      _
    // Predicated region
    $region26: #{tpu_custom_call.1} parent=1 // pred_check
      _
    $region27: #{tpu_custom_call.1} parent=1 // pred_check_branch
      %28 = sbr.rel (0) target = $region29
    $region28: #{tpu_custom_call.1} parent=1 // pred_region
      _
    $region29: #{tpu_custom_call.1} parent=1 // pred_fallthru
      _
    // Predicated region
    $region30: #{tpu_custom_call.1} parent=1 // pred_check
      _
    $region31: #{tpu_custom_call.1} parent=1 // pred_check_branch
      %30 = sbr.rel (0) target = $region33
    $region32: #{tpu_custom_call.1} parent=1 // pred_region
      _
    $region33: #{tpu_custom_call.1} parent=1 // pred_fallthru
      _
    // Predicated region
    $region34: #{tpu_custom_call.1} parent=1 // pred_check
      _
    $region35: #{tpu_custom_call.1} parent=1 // pred_check_branch
      %32 = sbr.rel (0) target = $region37
    $region36: #{tpu_custom_call.1} parent=1 // pred_region
      _
    $region37: #{tpu_custom_call.1} parent=1 // pred_fallthru
      _
    %v33 = vld [vmem:[%s2] sm:$0xff]
    %v34 = vld [vmem:[%s2 + $0x8] sm:$0xff]
    %v35 = vld [vmem:[%s0] sm:$0x3]
    %v36 = vld [vmem:[%s3] sm:$0xff]
    %v37 = vld [vmem:[%s3 + $0x8] sm:$0xff]
    %v38 = vld [vmem:[%s1] sm:$0x1]
    %40 = vset.pattern.permute.xlu0 0
    %41 = vperm.xlu0 %40, %v36
    %v42 = vpop.permute.xlu0 %41
    %45 = vset.pattern.permute.xlu0 0
    %46 = vperm.xlu0 %45, %v37
    %v47 = vpop.permute.xlu0 %46
    %v50 = vlaneseq
    %v51 = vshrl.u32 %v50, 7
    %v52 = vsub.s32 0, %v51
    %v53 = vrot.slane %v38, %v52
    %v55 = vmul.f32 %v42, %v53
    %v56 = vmul.f32 %v47, %v53
    %vm57 = vcmask 15360
    %v59 = vsel %vm57, %v33, 0
    %v62 = vsel %vm57, %v34, 0
    %vm64 = vcmask 1041408
    %v66 = vsel %vm64, %v35, 0
    %68 = vmatprep.subr.mxu0 0.0
    %69 = vmatpush1.msra.mxu0 %v66
    %70 = vmatprep.subr.mxu0 0.0
    %71 = vmatpush1.msra.mxu0 0.0
    %72 = vmatprep.subr.mxu0 0.0
    %73 = vmatpush1.msra.mxu0 0.0
    %74 = vmatprep.subr.mxu0 0.0
    %75 = vmatpush1.msra.mxu0 0.0
    %76 = vmatprep.subr.mxu0 0.0
    %77 = vmatpush1.msra.mxu0 0.0
    %78 = vmatprep.subr.mxu0 0.0
    %79 = vmatpush1.msra.mxu0 0.0
    %80 = vmatprep.subr.mxu0 0.0
    %81 = vmatpush1.msra.mxu0 0.0
    %82 = vmatprep.subr.mxu0 0.0
    %83 = vmatpush1.msra.mxu0 0.0
    %84 = vmatprep.subr.mxu0 0.0
    %85 = vmatpush1.msra.mxu0 0.0
    %86 = vmatprep.subr.mxu0 0.0
    %87 = vmatpush1.msra.mxu0 0.0
    %88 = vmatprep.subr.mxu0 0.0
    %89 = vmatpush1.msra.mxu0 0.0
    %90 = vmatprep.subr.mxu0 0.0
    %91 = vmatpush1.msra.mxu0 0.0
    %92 = vmatprep.subr.mxu0 0.0
    %93 = vmatpush1.msra.mxu0 0.0
    %94 = vmatprep.subr.mxu0 0.0
    %95 = vmatpush1.msra.mxu0 0.0
    %96 = vmatprep.subr.mxu0 0.0
    %97 = vmatpush1.msra.mxu0 0.0
    %98 = vmatprep.subr.mxu0 0.0
    %99 = vmatpush1.msra.mxu0 0.0
    %100 = vmatprep.subr.mxu0 0.0
    %101 = vmatpush1.msra.mxu0 0.0
    %102 = vmatprep.subr.mxu0 0.0
    %103 = vmatpush1.msra.mxu0 0.0
    %104 = vmatprep.subr.mxu0 0.0
    %105 = vmatpush1.msra.mxu0 0.0
    %106 = vmatprep.subr.mxu0 0.0
    %107 = vmatpush1.msra.mxu0 0.0
    %108 = vmatprep.subr.mxu0 0.0
    %109 = vmatpush1.msra.mxu0 0.0
    %110 = vmatprep.subr.mxu0 0.0
    %111 = vmatpush1.msra.mxu0 0.0
    %112 = vmatprep.subr.mxu0 0.0
    %113 = vmatpush1.msra.mxu0 0.0
    %114 = vmatprep.subr.mxu0 0.0
    %115 = vmatpush1.msra.mxu0 0.0
    %116 = vmatprep.subr.mxu0 0.0
    %117 = vmatpush1.msra.mxu0 0.0
    %118 = vmatprep.subr.mxu0 0.0
    %119 = vmatpush1.msra.mxu0 0.0
    %120 = vmatprep.subr.mxu0 0.0
    %121 = vmatpush1.msra.mxu0 0.0
    %122 = vmatprep.subr.mxu0 0.0
    %123 = vmatpush1.msra.mxu0 0.0
    %124 = vmatprep.subr.mxu0 0.0
    %125 = vmatpush1.msra.mxu0 0.0
    %126 = vmatprep.subr.mxu0 0.0
    %127 = vmatpush1.msra.mxu0 0.0
    %128 = vmatprep.subr.mxu0 0.0
    %129 = vmatpush1.msra.mxu0 0.0
    %130 = vmatprep.subr.mxu0 0.0
    %131 = vmatpush1.msra.mxu0 0.0
    %132 = vmatprep.mubr.f32.mxu0 0.0
    %133 = vmatmul.mubr.f32.gmra.mrb[0].mxu0 %v59
    %v134 = vpop.f32.mrb[0].mxu0
    %v135 = vadd.f32 %v55, %v134
    %v136 = vpop.f32.mrb[0].mxu0
    %137 = vmatprep.mubr.f32.mxu0 0.0
    %138 = vmatmul.mubr.f32.gmra.mrb[0].mxu0 %v62
    %v139 = vpop.f32.mrb[0].mxu0
    %v140 = vadd.f32 %v56, %v139
    %v141 = vpop.f32.mrb[0].mxu0
    %142 = vdwg.mxu0
    %v143 = vld [vmem:[%s4] sm:$0xff]
    %v144 = vld [vmem:[%s4 + $0x8] sm:$0xff]
    %146 = vset.pattern.permute.xlu0 0
    %147 = vperm.xlu0 %146, %v143
    %v148 = vpop.permute.xlu0 %147
    %151 = vset.pattern.permute.xlu0 0
    %152 = vperm.xlu0 %151, %v144
    %v153 = vpop.permute.xlu0 %152
    %v155 = vadd.f32 %v135, %v148
    %v156 = vadd.f32 %v140, %v153
    %v157 = vmax.f32 %v155, 0.0
    %v158 = vmax.f32 %v156, 0.0
    %v159 = vld [vmem:[%s5] sm:$0xff]
    %v160 = vld [vmem:[%s5 + $0x8] sm:$0xff]
    %v161 = vld [vmem:[%s6] sm:$0xff]
    %v162 = vld [vmem:[%s6 + $0x8] sm:$0xff]
    %164 = vset.pattern.permute.xlu0 0
    %165 = vperm.xlu0 %164, %v161
    %v166 = vpop.permute.xlu0 %165
    %169 = vset.pattern.permute.xlu0 0
    %170 = vperm.xlu0 %169, %v162
    %v171 = vpop.permute.xlu0 %170
    %vm173 = vcmask 130048
    %v175 = vsel %vm173, %v159, 0
    %v178 = vsel %vm173, %v160, 0
    %180 = vmatprep.subr.mxu0 0.0
    %181 = vmatpush1.msra.mxu0 %v157
    %182 = vmatprep.subr.mxu0 0.0
    %183 = vmatpush1.msra.mxu0 %v158
    %184 = vmatprep.subr.mxu0 0.0
    %185 = vmatpush1.msra.mxu0 0.0
    %186 = vmatprep.subr.mxu0 0.0
    %187 = vmatpush1.msra.mxu0 0.0
    %188 = vmatprep.subr.mxu0 0.0
    %189 = vmatpush1.msra.mxu0 0.0
    %190 = vmatprep.subr.mxu0 0.0
    %191 = vmatpush1.msra.mxu0 0.0
    %192 = vmatprep.subr.mxu0 0.0
    %193 = vmatpush1.msra.mxu0 0.0
    %194 = vmatprep.subr.mxu0 0.0
    %195 = vmatpush1.msra.mxu0 0.0
    %196 = vmatprep.subr.mxu0 0.0
    %197 = vmatpush1.msra.mxu0 0.0
    %198 = vmatprep.subr.mxu0 0.0
    %199 = vmatpush1.msra.mxu0 0.0
    %200 = vmatprep.subr.mxu0 0.0
    %201 = vmatpush1.msra.mxu0 0.0
    %202 = vmatprep.subr.mxu0 0.0
    %203 = vmatpush1.msra.mxu0 0.0
    %204 = vmatprep.subr.mxu0 0.0
    %205 = vmatpush1.msra.mxu0 0.0
    %206 = vmatprep.subr.mxu0 0.0
    %207 = vmatpush1.msra.mxu0 0.0
    %208 = vmatprep.subr.mxu0 0.0
    %209 = vmatpush1.msra.mxu0 0.0
    %210 = vmatprep.subr.mxu0 0.0
    %211 = vmatpush1.msra.mxu0 0.0
    %212 = vmatprep.subr.mxu0 0.0
    %213 = vmatpush1.msra.mxu0 0.0
    %214 = vmatprep.subr.mxu0 0.0
    %215 = vmatpush1.msra.mxu0 0.0
    %216 = vmatprep.subr.mxu0 0.0
    %217 = vmatpush1.msra.mxu0 0.0
    %218 = vmatprep.subr.mxu0 0.0
    %219 = vmatpush1.msra.mxu0 0.0
    %220 = vmatprep.subr.mxu0 0.0
    %221 = vmatpush1.msra.mxu0 0.0
    %222 = vmatprep.subr.mxu0 0.0
    %223 = vmatpush1.msra.mxu0 0.0
    %224 = vmatprep.subr.mxu0 0.0
    %225 = vmatpush1.msra.mxu0 0.0
    %226 = vmatprep.subr.mxu0 0.0
    %227 = vmatpush1.msra.mxu0 0.0
    %228 = vmatprep.subr.mxu0 0.0
    %229 = vmatpush1.msra.mxu0 0.0
    %230 = vmatprep.subr.mxu0 0.0
    %231 = vmatpush1.msra.mxu0 0.0
    %232 = vmatprep.subr.mxu0 0.0
    %233 = vmatpush1.msra.mxu0 0.0
    %234 = vmatprep.subr.mxu0 0.0
    %235 = vmatpush1.msra.mxu0 0.0
    %236 = vmatprep.subr.mxu0 0.0
    %237 = vmatpush1.msra.mxu0 0.0
    %238 = vmatprep.subr.mxu0 0.0
    %239 = vmatpush1.msra.mxu0 0.0
    %240 = vmatprep.subr.mxu0 0.0
    %241 = vmatpush1.msra.mxu0 0.0
    %242 = vmatprep.subr.mxu0 0.0
    %243 = vmatpush1.msra.mxu0 0.0
    %244 = vmatprep.mubr.f32.mxu0 0.0
    %245 = vmatmul.mubr.f32.gmra.mrb[0].mxu0 %v175
    %v246 = vpop.f32.mrb[0].mxu0
    %v247 = vadd.f32 %v166, %v246
    %v248 = vpop.f32.mrb[0].mxu0
    %249 = vmatprep.mubr.f32.mxu0 0.0
    %250 = vmatmul.mubr.f32.gmra.mrb[0].mxu0 %v178
    %v251 = vpop.f32.mrb[0].mxu0
    %v252 = vadd.f32 %v171, %v251
    %v253 = vpop.f32.mrb[0].mxu0
    %254 = vdwg.mxu0
    %v255 = vmax.f32 %v247, 0.0
    %v256 = vmax.f32 %v252, 0.0
    %v257 = vld [vmem:[%s7] sm:$0x3]
    %v258 = vld [vmem:[%s8] sm:$0x3]
    %260 = vset.pattern.permute.xlu0 0
    %261 = vperm.xlu0 %260, %v258
    %v262 = vpop.permute.xlu0 %261
    %v265 = vsel %vm173, %v257, 0
    %267 = vmatprep.subr.mxu0 0.0
    %268 = vmatpush1.msra.mxu0 %v255
    %269 = vmatprep.subr.mxu0 0.0
    %270 = vmatpush1.msra.mxu0 %v256
    %271 = vmatprep.subr.mxu0 0.0
    %272 = vmatpush1.msra.mxu0 0.0
    %273 = vmatprep.subr.mxu0 0.0
    %274 = vmatpush1.msra.mxu0 0.0
    %275 = vmatprep.subr.mxu0 0.0
    %276 = vmatpush1.msra.mxu0 0.0
    %277 = vmatprep.subr.mxu0 0.0
    %278 = vmatpush1.msra.mxu0 0.0
    %279 = vmatprep.subr.mxu0 0.0
    %280 = vmatpush1.msra.mxu0 0.0
    %281 = vmatprep.subr.mxu0 0.0
    %282 = vmatpush1.msra.mxu0 0.0
    %283 = vmatprep.subr.mxu0 0.0
    %284 = vmatpush1.msra.mxu0 0.0
    %285 = vmatprep.subr.mxu0 0.0
    %286 = vmatpush1.msra.mxu0 0.0
    %287 = vmatprep.subr.mxu0 0.0
    %288 = vmatpush1.msra.mxu0 0.0
    %289 = vmatprep.subr.mxu0 0.0
    %290 = vmatpush1.msra.mxu0 0.0
    %291 = vmatprep.subr.mxu0 0.0
    %292 = vmatpush1.msra.mxu0 0.0
    %293 = vmatprep.subr.mxu0 0.0
    %294 = vmatpush1.msra.mxu0 0.0
    %295 = vmatprep.subr.mxu0 0.0
    %296 = vmatpush1.msra.mxu0 0.0
    %297 = vmatprep.subr.mxu0 0.0
    %298 = vmatpush1.msra.mxu0 0.0
    %299 = vmatprep.subr.mxu0 0.0
    %300 = vmatpush1.msra.mxu0 0.0
    %301 = vmatprep.subr.mxu0 0.0
    %302 = vmatpush1.msra.mxu0 0.0
    %303 = vmatprep.subr.mxu0 0.0
    %304 = vmatpush1.msra.mxu0 0.0
    %305 = vmatprep.subr.mxu0 0.0
    %306 = vmatpush1.msra.mxu0 0.0
    %307 = vmatprep.subr.mxu0 0.0
    %308 = vmatpush1.msra.mxu0 0.0
    %309 = vmatprep.subr.mxu0 0.0
    %310 = vmatpush1.msra.mxu0 0.0
    %311 = vmatprep.subr.mxu0 0.0
    %312 = vmatpush1.msra.mxu0 0.0
    %313 = vmatprep.subr.mxu0 0.0
    %314 = vmatpush1.msra.mxu0 0.0
    %315 = vmatprep.subr.mxu0 0.0
    %316 = vmatpush1.msra.mxu0 0.0
    %317 = vmatprep.subr.mxu0 0.0
    %318 = vmatpush1.msra.mxu0 0.0
    %319 = vmatprep.subr.mxu0 0.0
    %320 = vmatpush1.msra.mxu0 0.0
    %321 = vmatprep.subr.mxu0 0.0
    %322 = vmatpush1.msra.mxu0 0.0
    %323 = vmatprep.subr.mxu0 0.0
    %324 = vmatpush1.msra.mxu0 0.0
    %325 = vmatprep.subr.mxu0 0.0
    %326 = vmatpush1.msra.mxu0 0.0
    %327 = vmatprep.subr.mxu0 0.0
    %328 = vmatpush1.msra.mxu0 0.0
    %329 = vmatprep.subr.mxu0 0.0
    %330 = vmatpush1.msra.mxu0 0.0
    %331 = vmatprep.mubr.f32.mxu0 0.0
    %332 = vmatmul.mubr.f32.gmra.mrb[0].mxu0 %v265
    %v333 = vpop.f32.mrb[0].mxu0
    %v334 = vadd.f32 %v262, %v333
    %v335 = vpop.f32.mrb[0].mxu0
    %336 = vdwg.mxu0
    %vm337 = vcmask 58368
    %338 = vst.msk [vmem:[#allocation2] sm:$0x3] %vm337, %v334
    // Predicated region
    $region38: #{tpu_custom_call.1} parent=1 // pred_check
      _
    $region39: #{tpu_custom_call.1} parent=1 // pred_check_branch
      %340 = sbr.rel (0) target = $region41
    $region40: #{tpu_custom_call.1} parent=1 // pred_region
      %s342 = ssub.s32 32, 32
      %343 = vsyncadd [#allocation3], %s342
      %s345 = sshll.u32 [#allocation2], 4
      %s346 = int_to_ptr.vmem [resolvable:$true] %s345
      %348 = dma.vmem_to_hbm [thread:$0]  %s346, 32, %s9, [#allocation3]
    $region41: #{tpu_custom_call.1} parent=1 // pred_fallthru
      _
    // Predicated region
    $region42: #{tpu_custom_call.1} parent=1 // pred_check
      _
    $region43: #{tpu_custom_call.1} parent=1 // pred_check_branch
      %350 = sbr.rel (0) target = $region45
    $region44: #{tpu_custom_call.1} parent=1 // pred_region
      %351 = dma.done [#allocation3], 32
    $region45: #{tpu_custom_call.1} parent=1 // pred_fallthru
      _
    %352 = vsyncpa [#allocation3], 1

</llo_original>
